<compile_context>
chip_gen: v5e
topology: v5e:2x2
jax: 0.10.0
libtpu: 0.0.40
codegen_flags: <defaults>
</compile_context>

<pallas_src>
import jax
import jax.numpy as jnp
from jax.experimental import pallas as pl
from jax.experimental.pallas import tpu as pltpu

_LANE = 128                 # TPU lane width
_SUB = 8                    # sublanes per f32 vreg
_SLAB = _SUB * _LANE        # 1024 samples = one fully-dense (8,128) f32 tile
_MAX_TILE_R = 4096          # (2,4096,128) f32 in = 4 MiB, (4096,128) out = 2 MiB per step
_TARGET_STEPS = 4           # >=4 grid steps so v7x's second TensorCore gets work


def and_kernel(wb_ref, x_ref, o_ref):
    # wb_ref: SMEM (3,) f32 = [w0, w1, b]
    # x_ref : VMEM (2, tile_r, 128) f32  -- feature planes, batch on sublanes+lanes
    # o_ref : VMEM (tile_r, 128) f32
    w0 = wb_ref[0]
    w1 = wb_ref[1]
    b = wb_ref[2]
    # Linear(2, 1) on the VPU: scalar-splat muls + adds over a dense (tile_r,128) slab.
    y = x_ref[0] * w0 + x_ref[1] * w1 + b
    # Exact sigmoid via a single EUP transcendental: sigmoid(y) = 0.5*tanh(y/2) + 0.5.
    o_ref[...] = 0.5 * jnp.tanh(0.5 * y) + 0.5


def _pick_tile_r(R):
    """Rows (of 128 lanes) per grid step. R is a multiple of _SUB."""
    tile_r = min(_MAX_TILE_R, R)
    if R >= _TARGET_STEPS * _SUB:
        # Cap the tile so the grid has >= _TARGET_STEPS steps (feeds both TCs on v7x),
        # keeping tile_r a multiple of 8 for the (8,128) block constraint.
        cap = ((pl.cdiv(R, _TARGET_STEPS) + _SUB - 1) // _SUB) * _SUB
        tile_r = min(tile_r, cap)
    return tile_r


def and_model_forward(x, weight, bias):
    """Forward pass of ANDModel: sigmoid(x @ weight.T + bias).

    x: (B, 2) f32; weight: (1, 2) f32 (PyTorch nn.Linear layout); bias: (1,) f32.
    Returns (B, 1) f32.
    """
    B = x.shape[0]
    # Pad the batch only up to one (8,128) slab multiple (<= 1023 extra samples),
    # never to a multiple of the tile; ragged last blocks are handled by pl.cdiv.
    R = max(_SUB, pl.cdiv(B, _LANE))
    R = ((R + _SUB - 1) // _SUB) * _SUB
    b_pad = R * _LANE

    tile_r = _pick_tile_r(R)
    grid = (pl.cdiv(R, tile_r),)

    # De-interleave the two row-major-interleaved features into separate
    # sublane/lane-dense planes: (B, 2) -> (2, R, 128). Single pad+transpose copy.
    x_p = jnp.pad(x.astype(jnp.float32), ((0, b_pad - B), (0, 0)))
    x_t = x_p.T.reshape(2, R, _LANE)

    wb = jnp.concatenate(
        [weight.reshape(-1).astype(jnp.float32),
         bias.reshape(-1).astype(jnp.float32)]
    )  # (3,) = [w0, w1, b]

    out = pl.pallas_call(
        and_kernel,
        out_shape=jax.ShapeDtypeStruct((R, _LANE), jnp.float32),
        grid=grid,
        in_specs=[
            pl.BlockSpec(memory_space=pltpu.MemorySpace.SMEM),          # [w0, w1, b]
            pl.BlockSpec((2, tile_r, _LANE), lambda i: (0, i, 0)),      # x feature planes
        ],
        out_specs=pl.BlockSpec((tile_r, _LANE), lambda i: (i, 0)),
        compiler_params=pltpu.CompilerParams(
            # Batch axis is embarrassingly parallel -> shards across v7x's 2 TCs.
            # Worst-case VMEM: (4 MiB in + 2 MiB out) * 2 buffers = 12 MiB, well
            # under the 32 MiB scoped default, so no vmem_limit_bytes override.
            dimension_semantics=("parallel",),
        ),
    )(wb, x_t)

    # (R, 128) slab flattens back to sample order r*128 + l; drop the padding.
    return out.reshape(b_pad)[:B].reshape(B, 1)


if __name__ == "__main__":
    key = jax.random.PRNGKey(0)
    kx, kw, kb, kx2, kx3 = jax.random.split(key, 5)

    # nn.Linear(2, 1) default init: U(-1/sqrt(in_features), 1/sqrt(in_features)).
    bound = 1.0 / jnp.sqrt(2.0)
    weight = jax.random.uniform(kw, (1, 2), jnp.float32, minval=-bound, maxval=bound)
    bias = jax.random.uniform(kb, (1,), jnp.float32, minval=-bound, maxval=bound)

    # Small batch of 2-feature inputs (AND truth-table style inputs).
    x = jax.random.uniform(kx, (8, 2), jnp.float32)
    out = jax.block_until_ready(and_model_forward(x, weight, bias))
    ref = jax.nn.sigmoid(x @ weight.T + bias)
    assert out.shape == (8, 1)
    assert jnp.allclose(out, ref, atol=1e-5), "mismatch vs reference (B=8)"

    # Non-multiple-of-128 batch to exercise padding/slicing.
    x2 = jax.random.uniform(kx2, (300, 2), jnp.float32)
    out2 = jax.block_until_ready(and_model_forward(x2, weight, bias))
    ref2 = jax.nn.sigmoid(x2 @ weight.T + bias)
    assert out2.shape == (300, 1)
    assert jnp.allclose(out2, ref2, atol=1e-5), "mismatch vs reference (B=300)"

    # Batch that produces a multi-step (4-step) grid to exercise the parallel axis.
    x3 = jax.random.uniform(kx3, (4096, 2), jnp.float32)
    out3 = jax.block_until_ready(and_model_forward(x3, weight, bias))
    ref3 = jax.nn.sigmoid(x3 @ weight.T + bias)
    assert out3.shape == (4096, 1)
    assert jnp.allclose(out3, ref3, atol=1e-5), "mismatch vs reference (B=4096)"

    print("KERNEL_OK")
</pallas_src>

<mosaic_0001>
module attributes {stable_mosaic.version = 11 : i64} {
  func.func @and_kernel(%arg0: i32, %arg1: memref<3xf32, #tpu.memory_space<smem>>, %arg2: memref<2x8x128xf32, #tpu.memory_space<vmem>>, %arg3: memref<8x128xf32, #tpu.memory_space<vmem>>) attributes {dimension_semantics = [#tpu.dimension_semantics<parallel>], iteration_bounds = array<i64: 1>, scalar_prefetch = 0 : i64, scratch_operands = 0 : i64, tpu.core_type = #tpu.core_type<tc>, window_params = [{transform_indices = @transform_0, window_bounds = array<i64: 3>}, {transform_indices = @transform_1, window_bounds = array<i64: 2, 8, 128>}, {transform_indices = @transform_2, window_bounds = array<i64: 8, 128>}]} {
    %c0 = arith.constant 0 : index
    %0 = memref.load %arg1[%c0] : memref<3xf32, #tpu.memory_space<smem>>
    %c1 = arith.constant 1 : index
    %1 = memref.load %arg1[%c1] : memref<3xf32, #tpu.memory_space<smem>>
    %c2 = arith.constant 2 : index
    %2 = memref.load %arg1[%c2] : memref<3xf32, #tpu.memory_space<smem>>
    %c0_0 = arith.constant 0 : index
    %c0_1 = arith.constant 0 : index
    %c0_2 = arith.constant 0 : index
    %3 = vector.load %arg2[%c0_0, %c0_1, %c0_2] : memref<2x8x128xf32, #tpu.memory_space<vmem>>, vector<1x8x128xf32>
    %4 = vector.shape_cast %3 : vector<1x8x128xf32> to vector<8x128xf32>
    %5 = vector.broadcast %0 : f32 to vector<8x128xf32>
    %6 = arith.mulf %4, %5 : vector<8x128xf32>
    %c1_3 = arith.constant 1 : index
    %c0_4 = arith.constant 0 : index
    %c0_5 = arith.constant 0 : index
    %7 = vector.load %arg2[%c1_3, %c0_4, %c0_5] : memref<2x8x128xf32, #tpu.memory_space<vmem>>, vector<1x8x128xf32>
    %8 = vector.shape_cast %7 : vector<1x8x128xf32> to vector<8x128xf32>
    %9 = vector.broadcast %1 : f32 to vector<8x128xf32>
    %10 = arith.mulf %8, %9 : vector<8x128xf32>
    %11 = arith.addf %6, %10 : vector<8x128xf32>
    %12 = vector.broadcast %2 : f32 to vector<8x128xf32>
    %13 = arith.addf %11, %12 : vector<8x128xf32>
    %cst = arith.constant 5.000000e-01 : f32
    %14 = vector.broadcast %cst : f32 to vector<8x128xf32>
    %15 = arith.mulf %14, %13 : vector<8x128xf32>
    %16 = math.tanh %15 : vector<8x128xf32>
    %cst_6 = arith.constant 5.000000e-01 : f32
    %17 = vector.broadcast %cst_6 : f32 to vector<8x128xf32>
    %18 = arith.mulf %17, %16 : vector<8x128xf32>
    %cst_7 = arith.constant 5.000000e-01 : f32
    %19 = vector.broadcast %cst_7 : f32 to vector<8x128xf32>
    %20 = arith.addf %18, %19 : vector<8x128xf32>
    %c0_8 = arith.constant 0 : index
    %c0_9 = arith.constant 0 : index
    %21 = vector.load %arg3[%c0_8, %c0_9] : memref<8x128xf32, #tpu.memory_space<vmem>>, vector<8x128xf32>
    tpu.vector_store %arg3[%c0_8, %c0_9], %20 {strides = array<i32>} : memref<8x128xf32, #tpu.memory_space<vmem>>, vector<8x128xf32>,
    return
  }
  func.func @transform_0(%arg0: i32) -> i32 {
    %c0_i32 = arith.constant 0 : i32
    %c0_i32_0 = arith.constant 0 : i32
    return %c0_i32 : i32
  }
  func.func @transform_1(%arg0: i32) -> (i32, i32, i32) {
    %c0_i32 = arith.constant 0 : i32
    %c0_i32_0 = arith.constant 0 : i32
    %c0_i32_1 = arith.constant 0 : i32
    return %c0_i32, %arg0, %c0_i32_0 : i32, i32, i32
  }
  func.func @transform_2(%arg0: i32) -> (i32, i32) {
    %c0_i32 = arith.constant 0 : i32
    %c0_i32_0 = arith.constant 0 : i32
    return %arg0, %c0_i32 : i32, i32
  }
}

</mosaic_0001>

<llo_original>
// kernel: tpu_custom_call.1
$region0: #{tpu_custom_call.1}
  #allocation0 [shape = 'u32[]', space=smem, size = 0x4, offset = 0x4, fixed_abs, tag = 'smem constant byte address 0x4 - core index']
  #allocation1 [shape = 'u32[72,128]{1,0:T(1,128)}', space=vmem, size = 0x9000, scoped, tag = 'internal scratch']
  %s0 = inlined_call_operand.hbm [shape: f32[3], index: 0, kind: input, shape index: {}]
  %s1 = inlined_call_operand.hbm [shape: f32[2,8,128], index: 1, kind: input, shape index: {}]
  %s2 = inlined_call_operand.hbm [shape: f32[8,128], index: 2, kind: output, shape index: {}]
  %s3 = sld [smem:[#allocation0]]
  $region26: #{tpu_custom_call.1} parent=0
    _
  %s5 = ssub.s32 1, %s3
  %s6 = scalar_select 0, %s5, %s3
  $region1: #{tpu_custom_call.1} parent=0
    #allocation2 [shape = 'u8[512]{0}', space=smem, size = 0x200, scoped, tag = 'input window, operand 0, single buffered']
    #allocation3 [shape = 's32[1]{0}', space=sflag, size = 0x4, scoped, tag = 'scoped memory for tpu_custom_call.1']
    #allocation4 [shape = 's32[1]{0}', space=sflag, size = 0x4, scoped, tag = 'scoped memory for tpu_custom_call.1']
    #allocation5 [shape = 's32[1]{0}', space=sflag, size = 0x4, scoped, tag = 'scoped memory for tpu_custom_call.1']
    #allocation6 [shape = 'u8[8192]{0}', space=vmem, size = 0x2000, scoped, tag = 'input window, operand 1, single buffered']
    #allocation7 [shape = 'u8[4096]{0}', space=vmem, size = 0x1000, scoped, tag = 'output window, operand 0, single buffered']
    %7 = vsyncpa [#allocation5], 0
    %8 = vsyncpa [#allocation3], 0
    %9 = vsyncpa [#allocation4], 0
    // Predicated region
    $region2: #{tpu_custom_call.1} parent=1 // pred_check
      _
    $region3: #{tpu_custom_call.1} parent=1 // pred_check_branch
      %11 = sbr.rel (0) target = $region5
    $region4: #{tpu_custom_call.1} parent=1 // pred_region
      %13 = vsyncadd [#allocation5], 0
      %s15 = sshll.u32 %s0, 4
      %s16 = int_to_ptr.hbm [resolvable:$true] %s15
      %18 = dma.hbm_to_smem %s16, 16, [#allocation2], [#allocation5]
    $region5: #{tpu_custom_call.1} parent=1 // pred_fallthru
      _
    // Predicated region
    $region6: #{tpu_custom_call.1} parent=1 // pred_check
      _
    $region7: #{tpu_custom_call.1} parent=1 // pred_check_branch
      %20 = sbr.rel (0) target = $region9
    $region8: #{tpu_custom_call.1} parent=1 // pred_region
      %22 = vsyncadd [#allocation3], 0
      %s23 = sshll.u32 %s1, 4
      %s24 = int_to_ptr.hbm [resolvable:$true] %s23
      %s25 = sshll.u32 [#allocation6], 4
      %s26 = int_to_ptr.vmem [resolvable:$true] %s25
      %31 = dma.hbm_to_vmem [thread:$0]  %s24, 256, %s26, [#allocation3], 128, 128, 8
    $region9: #{tpu_custom_call.1} parent=1 // pred_fallthru
      _
    // Predicated region
    $region10: #{tpu_custom_call.1} parent=1 // pred_check
      _
    $region11: #{tpu_custom_call.1} parent=1 // pred_check_branch
      %33 = sbr.rel (0) target = $region13
    $region12: #{tpu_custom_call.1} parent=1 // pred_region
      %35 = dma.done [#allocation5], 16
    $region13: #{tpu_custom_call.1} parent=1 // pred_fallthru
      _
    // Predicated region
    $region14: #{tpu_custom_call.1} parent=1 // pred_check
      _
    $region15: #{tpu_custom_call.1} parent=1 // pred_check_branch
      %37 = sbr.rel (0) target = $region17
    $region16: #{tpu_custom_call.1} parent=1 // pred_region
      %39 = dma.done [#allocation3], 256
    $region17: #{tpu_custom_call.1} parent=1 // pred_fallthru
      _
    %40 = sfence
    %s41 = sld [smem:[#allocation2]]
    %s42 = sld [smem:[#allocation2 + $0x1]]
    %s43 = sld [smem:[#allocation2 + $0x2]]
    %v44 = vld [vmem:[#allocation6] sm:$0xff]
    %v45 = vstv %s41
    %v46 = vmul.f32 %v44, %v45
    %s47 = scalar_lea.vmem [#allocation6], 8
    %v48 = vld [vmem:[%s47] sm:$0xff]
    %v49 = vstv %s42
    %v50 = vmul.f32 %v48, %v49
    %v51 = vadd.f32 %v46, %v50
    %v52 = vstv %s43
    %v53 = vadd.f32 %v51, %v52
    %v54 = vmul.f32 %v53, 0.5
    %v55 = vtanh.pop %v54
    %v56 = vmul.f32 %v55, 0.5
    %v57 = vadd.f32 %v56, 0.5
    %58 = vst [vmem:[#allocation7] sm:$0xff] %v57
    // Predicated region
    $region18: #{tpu_custom_call.1} parent=1 // pred_check
      _
    $region19: #{tpu_custom_call.1} parent=1 // pred_check_branch
      %60 = sbr.rel (0) target = $region21
    $region20: #{tpu_custom_call.1} parent=1 // pred_region
      %62 = vsyncadd [#allocation4], 0
      %s64 = sshll.u32 [#allocation7], 4
      %s65 = int_to_ptr.vmem [resolvable:$true] %s64
      %s66 = sshll.u32 %s2, 4
      %s67 = int_to_ptr.hbm [resolvable:$true] %s66
      %69 = dma.vmem_to_hbm [thread:$0]  %s65, 128, %s67, [#allocation4]
    $region21: #{tpu_custom_call.1} parent=1 // pred_fallthru
      _
    // Predicated region
    $region22: #{tpu_custom_call.1} parent=1 // pred_check
      _
    $region23: #{tpu_custom_call.1} parent=1 // pred_check_branch
      %71 = sbr.rel (0) target = $region25
    $region24: #{tpu_custom_call.1} parent=1 // pred_region
      %73 = dma.done [#allocation4], 128
    $region25: #{tpu_custom_call.1} parent=1 // pred_fallthru
      _
    %74 = vsyncpa [#allocation3], 1
    %75 = vsyncpa [#allocation4], 1
    %76 = vsyncpa [#allocation5], 1

</llo_original>
